<compile_context>
chip_gen: v7x
topology: tpu7x:2x2x1
jax: 0.10.0
libtpu: 0.0.40
codegen_flags: <defaults>
</compile_context>

<pallas_src>
import functools

import jax
import jax.numpy as jnp
from jax.experimental import pallas as pl
from jax.experimental.pallas import tpu as pltpu

_LANE = 128
_SUBLANE = 8


def _round_up(x: int, m: int) -> int:
    return ((x + m - 1) // m) * m


def _simple_gate_kernel(x_ref, w_ref, b_ref, o_ref, *, matmul_dtype):
    # x_ref: (TILE_M, K_pad)  w_ref: (K_pad, N_pad)  b_ref: (1, N_pad)  o_ref: (TILE_M, N_pad)
    x = x_ref[...].astype(matmul_dtype)
    w = w_ref[...].astype(matmul_dtype)
    z = jnp.dot(x, w, preferred_element_type=jnp.float32)   # MXU, f32 accumulate
    z = z + b_ref[...]                                       # bias + activation stay f32
    o_ref[...] = (z * jax.nn.sigmoid(z)).astype(o_ref.dtype)  # SiLU: x * sigmoid(x)


def prepare_simple_gate_params(weight, bias):
    """Pre-transpose + lane-pad the nn.Linear params once (outside the hot path).

    weight: (n_frequencies, input_size)  -- PyTorch nn.Linear convention
    bias:   (n_frequencies,)
    returns (w_t_pad: (K_pad, N_pad), b_pad: (1, N_pad))
    """
    n_freq, k = weight.shape
    k_pad = _round_up(max(k, _LANE), _LANE)
    n_pad = _round_up(max(n_freq, _LANE), _LANE)
    w_t_pad = jnp.zeros((k_pad, n_pad), weight.dtype).at[:k, :n_freq].set(weight.T)
    b_pad = jnp.zeros((1, n_pad), bias.dtype).at[0, :n_freq].set(bias)
    return w_t_pad, b_pad


def simple_gate_forward(x, w_t_pad, b_pad, n_frequencies,
                        tile_m: int = 512, matmul_dtype=jnp.float32):
    """
    x:        (B, H, input_size) float32
    w_t_pad:  (K_pad, N_pad)  pre-transposed, zero-padded weight (from prepare_simple_gate_params)
    b_pad:    (1, N_pad)      zero-padded bias
    returns   (B, H, n_frequencies)
    """
    B, H, K = x.shape
    K_pad, N_pad = w_t_pad.shape
    M = B * H

    # M tile: sublane-aligned, no larger than (padded) M.
    tile_m = min(tile_m, _round_up(M, _SUBLANE))
    M_pad = _round_up(M, tile_m)

    x2d = x.reshape(M, K)
    if (M_pad, K_pad) != (M, K):
        x2d = jnp.zeros((M_pad, K_pad), x.dtype).at[:M, :K].set(x2d)

    grid = (M_pad // tile_m,)

    # VMEM budget: double-buffered x/out tiles + resident weight + bias, 2x headroom,
    # clamped to stay comfortably inside v7x's 64 MiB physical VMEM.
    f32 = 4
    vmem_need = f32 * (2 * tile_m * (K_pad + N_pad) + K_pad * N_pad + N_pad)
    vmem_limit = int(min(max(2 * vmem_need, 16 * 1024 * 1024), 48 * 1024 * 1024))

    out = pl.pallas_call(
        functools.partial(_simple_gate_kernel, matmul_dtype=matmul_dtype),
        out_shape=jax.ShapeDtypeStruct((M_pad, N_pad), x.dtype),
        grid_spec=pltpu.PrefetchScalarGridSpec(
            num_scalar_prefetch=0,
            grid=grid,
            in_specs=[
                pl.BlockSpec((tile_m, K_pad), lambda i: (i, 0)),   # streamed per tile
                pl.BlockSpec((K_pad, N_pad), lambda i: (0, 0)),    # weight pinned in VMEM
                pl.BlockSpec((1, N_pad), lambda i: (0, 0)),        # bias pinned in VMEM
            ],
            out_specs=pl.BlockSpec((tile_m, N_pad), lambda i: (i, 0)),
        ),
        compiler_params=pltpu.CompilerParams(
            dimension_semantics=("parallel",),   # no reduction axis; shard M tiles across TCs (v7x)
            vmem_limit_bytes=vmem_limit,
        ),
    )(x2d, w_t_pad, b_pad)

    return out[:M, :n_frequencies].reshape(B, H, n_frequencies)


if __name__ == "__main__":
    # Small shapes consistent with the module's forward: x is (B, H, input_size).
    B, H, INPUT_SIZE, N_FREQ = 2, 8, 32, 16

    key = jax.random.PRNGKey(0)
    kx, kw, kb = jax.random.split(key, 3)

    x = jax.random.normal(kx, (B, H, INPUT_SIZE), dtype=jnp.float32)
    # Deterministic parameters (nn.Linear shapes: weight (N, K), bias (N,)).
    weight = jax.random.normal(kw, (N_FREQ, INPUT_SIZE), dtype=jnp.float32) * 0.1
    bias = jax.random.normal(kb, (N_FREQ,), dtype=jnp.float32) * 0.1

    # One-time parameter prep (transpose + pad) outside the per-call path.
    w_t_pad, b_pad = prepare_simple_gate_params(weight, bias)

    fwd = jax.jit(functools.partial(simple_gate_forward, n_frequencies=N_FREQ))
    out = fwd(x, w_t_pad, b_pad)
    out = jax.block_until_ready(out)

    # Reference in plain JAX (dropout = identity at inference).
    z_ref = x.reshape(-1, INPUT_SIZE) @ weight.T + bias
    ref = (z_ref * jax.nn.sigmoid(z_ref)).reshape(B, H, N_FREQ)

    assert out.shape == (B, H, N_FREQ)
    assert jnp.allclose(out, ref, atol=1e-5, rtol=1e-5)

    print("KERNEL_OK")
</pallas_src>

<mosaic_0001>
module attributes {stable_mosaic.version = 11 : i64} {
  func.func @_simple_gate_kernel(%arg0: i32, %arg1: memref<16x128xf32, #tpu.memory_space<vmem>>, %arg2: memref<128x128xf32, #tpu.memory_space<vmem>>, %arg3: memref<1x128xf32, #tpu.memory_space<vmem>>, %arg4: memref<16x128xf32, #tpu.memory_space<vmem>>) attributes {dimension_semantics = [#tpu.dimension_semantics<parallel>], iteration_bounds = array<i64: 1>, scalar_prefetch = 0 : i64, scratch_operands = 0 : i64, tpu.core_type = #tpu.core_type<tc>, window_params = [{transform_indices = @transform_0, window_bounds = array<i64: 16, 128>}, {pipeline_mode = #tpu.pipeline_mode<synchronous>, transform_indices = @transform_1, window_bounds = array<i64: 128, 128>}, {pipeline_mode = #tpu.pipeline_mode<synchronous>, transform_indices = @transform_2, window_bounds = array<i64: 1, 128>}, {transform_indices = @transform_3, window_bounds = array<i64: 16, 128>}]} {
    %c0 = arith.constant 0 : index
    %c0_0 = arith.constant 0 : index
    %0 = vector.load %arg1[%c0, %c0_0] : memref<16x128xf32, #tpu.memory_space<vmem>>, vector<16x128xf32>
    %c0_1 = arith.constant 0 : index
    %c0_2 = arith.constant 0 : index
    %1 = vector.load %arg2[%c0_1, %c0_2] : memref<128x128xf32, #tpu.memory_space<vmem>>, vector<128x128xf32>
    %cst = arith.constant dense<0.000000e+00> : vector<16x128xf32>
    %2 = tpu.matmul %0, %1, %cst {dimension_numbers = #tpu.dot_dimension_numbers<[1], [0], [0], [1], [0, 0, 1, 1], [], []>} : vector<16x128xf32>, vector<128x128xf32>, vector<16x128xf32> -> vector<16x128xf32>
    %c0_3 = arith.constant 0 : index
    %c0_4 = arith.constant 0 : index
    %3 = vector.load %arg3[%c0_3, %c0_4] : memref<1x128xf32, #tpu.memory_space<vmem>>, vector<1x128xf32>
    %4 = vector.broadcast %3 : vector<1x128xf32> to vector<16x128xf32>
    %5 = arith.addf %2, %4 : vector<16x128xf32>
    %6 = arith.negf %5 : vector<16x128xf32>
    %7 = math.exp %6 : vector<16x128xf32>
    %cst_5 = arith.constant 1.000000e+00 : f32
    %8 = vector.broadcast %cst_5 : f32 to vector<16x128xf32>
    %9 = arith.addf %8, %7 : vector<16x128xf32>
    %10 = arith.divf %8, %9 : vector<16x128xf32>
    %11 = arith.mulf %5, %10 : vector<16x128xf32>
    %c0_6 = arith.constant 0 : index
    %c0_7 = arith.constant 0 : index
    %12 = vector.load %arg4[%c0_6, %c0_7] : memref<16x128xf32, #tpu.memory_space<vmem>>, vector<16x128xf32>
    tpu.vector_store %arg4[%c0_6, %c0_7], %11 {strides = array<i32>} : memref<16x128xf32, #tpu.memory_space<vmem>>, vector<16x128xf32>,
    return
  }
  func.func @transform_0(%arg0: i32) -> (i32, i32) {
    %c0_i32 = arith.constant 0 : i32
    %c0_i32_0 = arith.constant 0 : i32
    return %arg0, %c0_i32 : i32, i32
  }
  func.func @transform_1(%arg0: i32) -> (i32, i32) {
    %c0_i32 = arith.constant 0 : i32
    %c0_i32_0 = arith.constant 0 : i32
    %c0_i32_1 = arith.constant 0 : i32
    return %c0_i32, %c0_i32_0 : i32, i32
  }
  func.func @transform_2(%arg0: i32) -> (i32, i32) {
    %c0_i32 = arith.constant 0 : i32
    %c0_i32_0 = arith.constant 0 : i32
    %c0_i32_1 = arith.constant 0 : i32
    return %c0_i32, %c0_i32_0 : i32, i32
  }
  func.func @transform_3(%arg0: i32) -> (i32, i32) {
    %c0_i32 = arith.constant 0 : i32
    %c0_i32_0 = arith.constant 0 : i32
    return %arg0, %c0_i32 : i32, i32
  }
}

</mosaic_0001>

<llo_original>
// kernel: simple_gate_forward.1
$region0: #{simple_gate_forward.1}
  #allocation0 [shape = 'u32[]', space=smem, size = 0x4, offset = 0x4, fixed_abs, tag = 'smem constant byte address 0x4 - core index']
  #allocation1 [shape = 'u32[144,128]{1,0:T(1,128)}', space=vmem, size = 0x12000, scoped, tag = 'internal scratch']
  %s0 = inlined_call_operand.vmem [shape: f32[16,128], index: 0, kind: input, shape index: {}]
  %s1 = inlined_call_operand.hbm [shape: f32[128,128], index: 1, kind: input, shape index: {}]
  %s2 = inlined_call_operand.vmem [shape: f32[1,128], index: 2, kind: input, shape index: {}]
  %s3 = inlined_call_operand.vmem [shape: f32[16,128], index: 3, kind: output, shape index: {}]
  %s4 = sld [smem:[#allocation0]]
  $region26: #{simple_gate_forward.1} parent=0
    _
  %s6 = ssub.s32 1, %s4
  %s7 = scalar_select 0, %s6, %s4
  $region1: #{simple_gate_forward.1} parent=0
    #allocation2 [shape = 'u8[65536]{0}', space=vmem, size = 0x10000, scoped, tag = 'input window, operand 1, single buffered']
    #allocation3 [shape = 's32[1]{0}', space=sflag, size = 0x4, scoped, tag = 'scoped memory for simple_gate_forward.1']
    %8 = vsyncpa [#allocation3], 0
    // Predicated region
    $region2: #{simple_gate_forward.1} parent=1 // pred_check
      _
    $region3: #{simple_gate_forward.1} parent=1 // pred_check_branch
      %10 = sbr.rel (0) target = $region5
    $region4: #{simple_gate_forward.1} parent=1 // pred_region
      _
    $region5: #{simple_gate_forward.1} parent=1 // pred_fallthru
      _
    // Predicated region
    $region6: #{simple_gate_forward.1} parent=1 // pred_check
      _
    $region7: #{simple_gate_forward.1} parent=1 // pred_check_branch
      %12 = sbr.rel (0) target = $region9
    $region8: #{simple_gate_forward.1} parent=1 // pred_region
      %s14 = ssub.s32 2048, 2048
      %15 = vsyncadd [#allocation3], %s14
      %s16 = sshll.u32 [#allocation2], 4
      %s17 = int_to_ptr.vmem [resolvable:$true] %s16
      %22 = dma.hbm_to_vmem [thread:$0]  %s1, 2048, %s17, [#allocation3], 128, 128, 8
    $region9: #{simple_gate_forward.1} parent=1 // pred_fallthru
      _
    // Predicated region
    $region10: #{simple_gate_forward.1} parent=1 // pred_check
      _
    $region11: #{simple_gate_forward.1} parent=1 // pred_check_branch
      %24 = sbr.rel (0) target = $region13
    $region12: #{simple_gate_forward.1} parent=1 // pred_region
      _
    $region13: #{simple_gate_forward.1} parent=1 // pred_fallthru
      _
    // Predicated region
    $region14: #{simple_gate_forward.1} parent=1 // pred_check
      _
    $region15: #{simple_gate_forward.1} parent=1 // pred_check_branch
      %26 = sbr.rel (0) target = $region17
    $region16: #{simple_gate_forward.1} parent=1 // pred_region
      %27 = dma.done [#allocation3], 2048
    $region17: #{simple_gate_forward.1} parent=1 // pred_fallthru
      _
    %v28 = vld [vmem:[%s0] sm:$0xff]
    %v29 = vld [vmem:[%s0 + $0x8] sm:$0xff]
    %v30 = vld [vmem:[#allocation2] sm:$0xff]
    %v31 = vld [vmem:[#allocation2 + $0x8] sm:$0xff]
    %v32 = vld [vmem:[#allocation2 + $0x10] sm:$0xff]
    %v33 = vld [vmem:[#allocation2 + $0x18] sm:$0xff]
    %v34 = vld [vmem:[#allocation2 + $0x20] sm:$0xff]
    %v35 = vld [vmem:[#allocation2 + $0x28] sm:$0xff]
    %v36 = vld [vmem:[#allocation2 + $0x30] sm:$0xff]
    %v37 = vld [vmem:[#allocation2 + $0x38] sm:$0xff]
    %v38 = vld [vmem:[#allocation2 + $0x40] sm:$0xff]
    %v39 = vld [vmem:[#allocation2 + $0x48] sm:$0xff]
    %v40 = vld [vmem:[#allocation2 + $0x50] sm:$0xff]
    %v41 = vld [vmem:[#allocation2 + $0x58] sm:$0xff]
    %v42 = vld [vmem:[#allocation2 + $0x60] sm:$0xff]
    %v43 = vld [vmem:[#allocation2 + $0x68] sm:$0xff]
    %v44 = vld [vmem:[#allocation2 + $0x70] sm:$0xff]
    %v45 = vld [vmem:[#allocation2 + $0x78] sm:$0xff]
    %v46 = vld [vmem:[%s2] sm:$0x1]
    %v48 = vlaneseq
    %v49 = vshrl.u32 %v48, 7
    %v50 = vsub.s32 0, %v49
    %v51 = vrot.slane %v46, %v50
    %53 = vmatprep.subr.mxu0 0.0
    %54 = vmatpush1.msra.mxu0 %v30
    %55 = vmatprep.subr.mxu0 0.0
    %56 = vmatpush1.msra.mxu0 %v31
    %57 = vmatprep.subr.mxu0 0.0
    %58 = vmatpush1.msra.mxu0 %v32
    %59 = vmatprep.subr.mxu0 0.0
    %60 = vmatpush1.msra.mxu0 %v33
    %61 = vmatprep.subr.mxu0 0.0
    %62 = vmatpush1.msra.mxu0 %v34
    %63 = vmatprep.subr.mxu0 0.0
    %64 = vmatpush1.msra.mxu0 %v35
    %65 = vmatprep.subr.mxu0 0.0
    %66 = vmatpush1.msra.mxu0 %v36
    %67 = vmatprep.subr.mxu0 0.0
    %68 = vmatpush1.msra.mxu0 %v37
    %69 = vmatprep.subr.mxu0 0.0
    %70 = vmatpush1.msra.mxu0 %v38
    %71 = vmatprep.subr.mxu0 0.0
    %72 = vmatpush1.msra.mxu0 %v39
    %73 = vmatprep.subr.mxu0 0.0
    %74 = vmatpush1.msra.mxu0 %v40
    %75 = vmatprep.subr.mxu0 0.0
    %76 = vmatpush1.msra.mxu0 %v41
    %77 = vmatprep.subr.mxu0 0.0
    %78 = vmatpush1.msra.mxu0 %v42
    %79 = vmatprep.subr.mxu0 0.0
    %80 = vmatpush1.msra.mxu0 %v43
    %81 = vmatprep.subr.mxu0 0.0
    %82 = vmatpush1.msra.mxu0 %v44
    %83 = vmatprep.subr.mxu0 0.0
    %84 = vmatpush1.msra.mxu0 %v45
    %85 = vmatprep.subr.mxu0 0.0
    %86 = vmatpush1.msra.mxu0 0.0
    %87 = vmatprep.subr.mxu0 0.0
    %88 = vmatpush1.msra.mxu0 0.0
    %89 = vmatprep.subr.mxu0 0.0
    %90 = vmatpush1.msra.mxu0 0.0
    %91 = vmatprep.subr.mxu0 0.0
    %92 = vmatpush1.msra.mxu0 0.0
    %93 = vmatprep.subr.mxu0 0.0
    %94 = vmatpush1.msra.mxu0 0.0
    %95 = vmatprep.subr.mxu0 0.0
    %96 = vmatpush1.msra.mxu0 0.0
    %97 = vmatprep.subr.mxu0 0.0
    %98 = vmatpush1.msra.mxu0 0.0
    %99 = vmatprep.subr.mxu0 0.0
    %100 = vmatpush1.msra.mxu0 0.0
    %101 = vmatprep.subr.mxu0 0.0
    %102 = vmatpush1.msra.mxu0 0.0
    %103 = vmatprep.subr.mxu0 0.0
    %104 = vmatpush1.msra.mxu0 0.0
    %105 = vmatprep.subr.mxu0 0.0
    %106 = vmatpush1.msra.mxu0 0.0
    %107 = vmatprep.subr.mxu0 0.0
    %108 = vmatpush1.msra.mxu0 0.0
    %109 = vmatprep.subr.mxu0 0.0
    %110 = vmatpush1.msra.mxu0 0.0
    %111 = vmatprep.subr.mxu0 0.0
    %112 = vmatpush1.msra.mxu0 0.0
    %113 = vmatprep.subr.mxu0 0.0
    %114 = vmatpush1.msra.mxu0 0.0
    %115 = vmatprep.subr.mxu0 0.0
    %116 = vmatpush1.msra.mxu0 0.0
    %117 = vmatprep.mubr.f32.mxu0 0.0
    %118 = vmatmul.mubr.f32.gmra.mrb[0].mxu0 %v28
    %v119 = vpop.f32.mrb[0].mxu0
    %v120 = vadd.f32 %v51, %v119
    %v121 = vpop.f32.mrb[0].mxu0
    %122 = vmatprep.mubr.f32.mxu0 0.0
    %123 = vmatmul.mubr.f32.gmra.mrb[0].mxu0 %v29
    %v124 = vpop.f32.mrb[0].mxu0
    %v125 = vadd.f32 %v51, %v124
    %v126 = vpop.f32.mrb[0].mxu0
    %127 = vdwg.mxu0
    %v128 = vxor.u32 %v120, 2147483648
    %v129 = vxor.u32 %v125, 2147483648
    %v130 = vmul.f32 %v128, 1.442695
    %v131 = vpow.pop %v130
    %v132 = vmul.f32 %v129, 1.442695
    %v133 = vpow.pop %v132
    %v134 = vadd.f32 %v131, 1.0
    %v135 = vadd.f32 %v133, 1.0
    %v136 = vrcp.pop %v134
    %v137 = vmul.f32 1.0, %v136
    %v138 = vrcp.pop %v135
    %v139 = vmul.f32 1.0, %v138
    %v140 = vmul.f32 %v120, %v137
    %v141 = vmul.f32 %v125, %v139
    %142 = vst [vmem:[%s3] sm:$0xff] %v140
    %143 = vst [vmem:[%s3 + $0x8] sm:$0xff] %v141
    // Predicated region
    $region18: #{simple_gate_forward.1} parent=1 // pred_check
      _
    $region19: #{simple_gate_forward.1} parent=1 // pred_check_branch
      %145 = sbr.rel (0) target = $region21
    $region20: #{simple_gate_forward.1} parent=1 // pred_region
      _
    $region21: #{simple_gate_forward.1} parent=1 // pred_fallthru
      _
    // Predicated region
    $region22: #{simple_gate_forward.1} parent=1 // pred_check
      _
    $region23: #{simple_gate_forward.1} parent=1 // pred_check_branch
      %147 = sbr.rel (0) target = $region25
    $region24: #{simple_gate_forward.1} parent=1 // pred_region
      _
    $region25: #{simple_gate_forward.1} parent=1 // pred_fallthru
      _
    %148 = vsyncpa [#allocation3], 1

</llo_original>
